<compile_context>
chip_gen: v7x
topology: tpu7x:2x2x1
jax: 0.10.0
libtpu: 0.0.40
codegen_flags: <defaults>
</compile_context>

<pallas_src>
import functools

import jax
import jax.numpy as jnp
from jax.experimental import pallas as pl
from jax.experimental.pallas import tpu as pltpu


def _round_up(x: int, m: int) -> int:
    return (x + m - 1) // m * m


def _gamma_and_step(vmin, vmax, bins, lengthscale):
    # Guard bins >= 2: linspace spacing (and the lengthscale=None gamma) is undefined
    # for a single bin.
    assert bins >= 2, "RBFExpansion requires bins >= 2"
    step = (float(vmax) - float(vmin)) / (float(bins) - 1.0)   # == np.diff(centers).mean()
    if lengthscale is None:
        # NOTE: intentionally gamma = 1/lengthscale (NOT 1/lengthscale**2) - this
        # reproduces the ALIGNN module exactly; do not "fix" it.
        gamma = 1.0 / step
    else:
        gamma = 1.0 / (float(lengthscale) ** 2)
    return gamma, step


# ---------------------------------------------------------------------------
# Lane-major kernel: output (bins, TN), samples on the 128-lane axis.
# gamma / vmin / step / bins are compile-time Python scalars (functools.partial).
# ---------------------------------------------------------------------------
def _rbf_lane_major_kernel(d_ref, o_ref, *, gamma, vmin, step, bins):
    # d_ref: (1, TN) f32, o_ref: (bins, TN)
    d = d_ref[...]                                                        # (1, TN)
    idx = jax.lax.broadcasted_iota(jnp.int32, (bins, 1), 0).astype(jnp.float32)
    c = vmin + step * idx                                                 # (bins, 1)
    diff = d - c                                                          # (bins, TN)
    o_ref[...] = jnp.exp((-gamma) * (diff * diff)).astype(o_ref.dtype)


def rbf_expansion_lane_major(distance: jax.Array,
                             vmin: float = 0.0,
                             vmax: float = 8.0,
                             bins: int = 40,
                             lengthscale=None,
                             tile_n: int = 16384,
                             out_dtype=jnp.float32) -> jax.Array:
    """Primary (fast) path: distance (N,) -> (bins, N) == PyTorch output transposed.

    Lane-dense output (samples on the 128-lane axis) -> unmasked stores and full
    EUP/VPU lane utilization.  No tile-sized padding and no wrapper slice copy.
    """
    assert distance.ndim == 1
    n = int(distance.shape[0])
    gamma, step = _gamma_and_step(vmin, vmax, bins, lengthscale)

    if n <= 256:
        # Single full-extent block (block dims == array dims, so no 128-alignment needed).
        tile = n
    else:
        # Lane-aligned tiles; clamp so the grid has >= 2 steps (v7x dual-TensorCore).
        tile = min(int(tile_n), _round_up(pl.cdiv(n, 2), 128))
        tile = max(128, _round_up(tile, 128))
    grid_n = pl.cdiv(n, tile)   # uneven final block handled by Pallas

    d2 = distance.astype(jnp.float32).reshape(1, n)   # metadata-only reshape, lane-dense

    kernel = functools.partial(
        _rbf_lane_major_kernel,
        gamma=float(gamma), vmin=float(vmin), step=float(step), bins=int(bins))

    out = pl.pallas_call(
        kernel,
        out_shape=jax.ShapeDtypeStruct((bins, n), out_dtype),
        grid_spec=pltpu.PrefetchScalarGridSpec(
            num_scalar_prefetch=0,
            grid=(grid_n,),
            in_specs=[pl.BlockSpec((1, tile), lambda i: (0, i))],
            out_specs=pl.BlockSpec((bins, tile), lambda i: (0, i)),
        ),
        compiler_params=pltpu.CompilerParams(
            dimension_semantics=("parallel",)),
    )(d2)
    return out


def rbf_expansion(distance: jax.Array,
                  vmin: float = 0.0,
                  vmax: float = 8.0,
                  bins: int = 40,
                  lengthscale=None,
                  tile_n: int = 16384,
                  out_dtype=jnp.float32) -> jax.Array:
    """PyTorch-layout wrapper: distance (N,) -> (N, bins), matching RBFExpansion.forward.

    Computes lane-dense (bins, N) inside the Pallas kernel and transposes outside
    (pure layout plumbing handled by XLA).  Performance-critical consumers that can
    accept the transposed layout should call rbf_expansion_lane_major directly and
    skip the transpose.
    """
    out_t = rbf_expansion_lane_major(distance, vmin=vmin, vmax=vmax, bins=bins,
                                     lengthscale=lengthscale, tile_n=tile_n,
                                     out_dtype=out_dtype)
    return out_t.T


# ---------------------------------------------------------------------------
# Pure-JAX reference (mirrors the PyTorch module).
# ---------------------------------------------------------------------------
def _rbf_reference(distance, vmin=0.0, vmax=8.0, bins=40, lengthscale=None):
    centers = jnp.linspace(vmin, vmax, bins, dtype=jnp.float32)
    if lengthscale is None:
        gamma = 1.0 / ((vmax - vmin) / (bins - 1))
    else:
        gamma = 1.0 / (lengthscale ** 2)
    return jnp.exp(-gamma * (distance[:, None] - centers[None, :]) ** 2)


if __name__ == "__main__":
    BINS = 40

    # Case 1: small ragged N -> single full-extent block; PyTorch (N, bins) layout.
    N1 = 203
    d1 = jax.random.uniform(jax.random.PRNGKey(0), (N1,), dtype=jnp.float32,
                            minval=0.0, maxval=8.0)
    out1 = jax.block_until_ready(rbf_expansion(d1, vmin=0.0, vmax=8.0, bins=BINS))
    ref1 = _rbf_reference(d1, bins=BINS)
    assert out1.shape == (N1, BINS) and out1.dtype == jnp.float32
    assert float(jnp.max(jnp.abs(out1 - ref1))) < 5e-5

    # Case 2: multi-step grid with an uneven final block (tile=512, grid=2), lane-major.
    N2 = 1000
    d2 = jax.random.uniform(jax.random.PRNGKey(1), (N2,), dtype=jnp.float32,
                            minval=0.0, maxval=8.0)
    out2 = jax.block_until_ready(
        rbf_expansion_lane_major(d2, vmin=0.0, vmax=8.0, bins=BINS))
    ref2 = _rbf_reference(d2, bins=BINS)
    assert out2.shape == (BINS, N2) and out2.dtype == jnp.float32
    assert float(jnp.max(jnp.abs(out2 - ref2.T))) < 5e-5

    # Case 3: explicit lengthscale path (gamma = 1/ls^2).
    out3 = jax.block_until_ready(
        rbf_expansion(d1, vmin=0.0, vmax=8.0, bins=BINS, lengthscale=0.5))
    ref3 = _rbf_reference(d1, bins=BINS, lengthscale=0.5)
    assert float(jnp.max(jnp.abs(out3 - ref3))) < 5e-5

    # Case 4: bf16 output (opt-in; ~2x HBM writeback saving on v5e/v6e). Looser tol.
    out4 = jax.block_until_ready(
        rbf_expansion_lane_major(d2, vmin=0.0, vmax=8.0, bins=BINS,
                                 out_dtype=jnp.bfloat16))
    assert out4.shape == (BINS, N2) and out4.dtype == jnp.bfloat16
    assert float(jnp.max(jnp.abs(out4.astype(jnp.float32) - ref2.T))) < 1e-2

    print("KERNEL_OK")
</pallas_src>

<mosaic_0001>
module attributes {stable_mosaic.version = 11 : i64} {
  func.func @_rbf_lane_major_kernel(%arg0: i32, %arg1: memref<1x203xf32, #tpu.memory_space<vmem>>, %arg2: memref<40x203xf32, #tpu.memory_space<vmem>>) attributes {dimension_semantics = [#tpu.dimension_semantics<parallel>], iteration_bounds = array<i64: 1>, scalar_prefetch = 0 : i64, scratch_operands = 0 : i64, tpu.core_type = #tpu.core_type<tc>, window_params = [{transform_indices = @transform_0, window_bounds = array<i64: 1, 203>}, {transform_indices = @transform_1, window_bounds = array<i64: 40, 203>}]} {
    %c0 = arith.constant 0 : index
    %c0_0 = arith.constant 0 : index
    %0 = vector.load %arg1[%c0, %c0_0] : memref<1x203xf32, #tpu.memory_space<vmem>>, vector<1x203xf32>
    %1 = tpu.iota {dimensions = array<i32: 0>} : vector<40x1xi32>
    %2 = arith.sitofp %1 : vector<40x1xi32> to vector<40x1xf32>
    %cst = arith.constant 0.205128208 : f32
    %3 = vector.broadcast %cst : f32 to vector<40x1xf32>
    %4 = arith.mulf %3, %2 : vector<40x1xf32>
    %cst_1 = arith.constant 0.000000e+00 : f32
    %5 = vector.broadcast %cst_1 : f32 to vector<40x1xf32>
    %6 = arith.addf %5, %4 : vector<40x1xf32>
    %7 = vector.broadcast %0 : vector<1x203xf32> to vector<40x203xf32>
    %8 = vector.broadcast %6 : vector<40x1xf32> to vector<40x203xf32>
    %9 = arith.subf %7, %8 : vector<40x203xf32>
    %10 = arith.mulf %9, %9 : vector<40x203xf32>
    %cst_2 = arith.constant -4.875000e+00 : f32
    %11 = vector.broadcast %cst_2 : f32 to vector<40x203xf32>
    %12 = arith.mulf %11, %10 : vector<40x203xf32>
    %13 = math.exp %12 : vector<40x203xf32>
    %c0_3 = arith.constant 0 : index
    %c0_4 = arith.constant 0 : index
    %14 = vector.load %arg2[%c0_3, %c0_4] : memref<40x203xf32, #tpu.memory_space<vmem>>, vector<40x203xf32>
    tpu.vector_store %arg2[%c0_3, %c0_4], %13 {strides = array<i32>} : memref<40x203xf32, #tpu.memory_space<vmem>>, vector<40x203xf32>,
    return
  }
  func.func @transform_0(%arg0: i32) -> (i32, i32) {
    %c0_i32 = arith.constant 0 : i32
    %c0_i32_0 = arith.constant 0 : i32
    return %c0_i32, %arg0 : i32, i32
  }
  func.func @transform_1(%arg0: i32) -> (i32, i32) {
    %c0_i32 = arith.constant 0 : i32
    %c0_i32_0 = arith.constant 0 : i32
    return %c0_i32, %arg0 : i32, i32
  }
}

</mosaic_0001>

<llo_original>
// kernel: tpu_custom_call.1
$region0: #{tpu_custom_call.1}
  #allocation0 [shape = 'u32[]', space=smem, size = 0x4, offset = 0x4, fixed_abs, tag = 'smem constant byte address 0x4 - core index']
  #allocation1 [shape = 'u32[144,128]{1,0:T(1,128)}', space=vmem, size = 0x12000, scoped, tag = 'internal scratch']
  %s0 = inlined_call_operand.hbm [shape: f32[1,203], index: 0, kind: input, shape index: {}]
  %s1 = inlined_call_operand.hbm [shape: f32[40,203], index: 1, kind: output, shape index: {}]
  %s2 = sld [smem:[#allocation0]]
  $region18: #{tpu_custom_call.1} parent=0
    _
  %s4 = ssub.s32 1, %s2
  %s5 = scalar_select 0, %s4, %s2
  $region1: #{tpu_custom_call.1} parent=0
    #allocation2 [shape = 'u8[1024]{0}', space=vmem, size = 0x400, scoped, tag = 'input window, operand 0, single buffered']
    #allocation3 [shape = 's32[1]{0}', space=sflag, size = 0x4, scoped, tag = 'scoped memory for tpu_custom_call.1']
    #allocation4 [shape = 's32[1]{0}', space=sflag, size = 0x4, scoped, tag = 'scoped memory for tpu_custom_call.1']
    #allocation5 [shape = 'u8[40960]{0}', space=vmem, size = 0xa000, scoped, tag = 'output window, operand 0, single buffered']
    %6 = vsyncpa [#allocation3], 0
    %7 = vsyncpa [#allocation4], 0
    // Predicated region
    $region2: #{tpu_custom_call.1} parent=1 // pred_check
      _
    $region3: #{tpu_custom_call.1} parent=1 // pred_check_branch
      %9 = sbr.rel (0) target = $region5
    $region4: #{tpu_custom_call.1} parent=1 // pred_region
      %s11 = ssub.s32 32, 32
      %12 = vsyncadd [#allocation3], %s11
      %s14 = sshll.u32 [#allocation2], 4
      %s15 = int_to_ptr.vmem [resolvable:$true] %s14
      %17 = dma.hbm_to_vmem [thread:$0]  %s0, 32, %s15, [#allocation3]
    $region5: #{tpu_custom_call.1} parent=1 // pred_fallthru
      _
    // Predicated region
    $region6: #{tpu_custom_call.1} parent=1 // pred_check
      _
    $region7: #{tpu_custom_call.1} parent=1 // pred_check_branch
      %19 = sbr.rel (0) target = $region9
    $region8: #{tpu_custom_call.1} parent=1 // pred_region
      %20 = dma.done [#allocation3], 32
    $region9: #{tpu_custom_call.1} parent=1 // pred_fallthru
      _
    %v21 = vld [vmem:[#allocation2] sm:$0x3]
    %v22 = vlaneseq
    %v23 = vshrl.u32 %v22, 7
    %v24 = vadd.s32 %v23, 8
    %v25 = vadd.s32 %v23, 16
    %v26 = vadd.s32 %v23, 24
    %v27 = vadd.s32 %v23, 32
    %v28 = vcvt.s32.f32 %v23
    %v29 = vcvt.s32.f32 %v24
    %v30 = vcvt.s32.f32 %v25
    %v31 = vcvt.s32.f32 %v26
    %v32 = vcvt.s32.f32 %v27
    %v33 = vmul.f32 %v28, 0.20512821
    %v34 = vmul.f32 %v29, 0.20512821
    %v35 = vmul.f32 %v30, 0.20512821
    %v36 = vmul.f32 %v31, 0.20512821
    %v37 = vmul.f32 %v32, 0.20512821
    %v38 = vadd.f32 %v33, 0.0
    %v39 = vadd.f32 %v34, 0.0
    %v40 = vadd.f32 %v35, 0.0
    %v41 = vadd.f32 %v36, 0.0
    %v42 = vadd.f32 %v37, 0.0
    %v44 = vlaneseq
    %v45 = vshrl.u32 %v44, 7
    %v46 = vsub.s32 0, %v45
    %v47 = vrot.slane %v21, %v46
    %v48 = vlaneseq
    %v49 = vshrl.u32 %v48, 7
    %v50 = vsub.s32 1, %v49
    %v51 = vrot.slane %v21, %v50
    %v54 = vsub.f32 %v47, %v38
    %v55 = vsub.f32 %v51, %v38
    %v56 = vsub.f32 %v47, %v39
    %v57 = vsub.f32 %v51, %v39
    %v58 = vsub.f32 %v47, %v40
    %v59 = vsub.f32 %v51, %v40
    %v60 = vsub.f32 %v47, %v41
    %v61 = vsub.f32 %v51, %v41
    %v62 = vsub.f32 %v47, %v42
    %v63 = vsub.f32 %v51, %v42
    %v64 = vmul.f32 %v54, %v54
    %v65 = vmul.f32 %v55, %v55
    %v66 = vmul.f32 %v56, %v56
    %v67 = vmul.f32 %v57, %v57
    %v68 = vmul.f32 %v58, %v58
    %v69 = vmul.f32 %v59, %v59
    %v70 = vmul.f32 %v60, %v60
    %v71 = vmul.f32 %v61, %v61
    %v72 = vmul.f32 %v62, %v62
    %v73 = vmul.f32 %v63, %v63
    %v74 = vmul.f32 %v64, -4.875
    %v75 = vmul.f32 %v65, -4.875
    %v76 = vmul.f32 %v66, -4.875
    %v77 = vmul.f32 %v67, -4.875
    %v78 = vmul.f32 %v68, -4.875
    %v79 = vmul.f32 %v69, -4.875
    %v80 = vmul.f32 %v70, -4.875
    %v81 = vmul.f32 %v71, -4.875
    %v82 = vmul.f32 %v72, -4.875
    %v83 = vmul.f32 %v73, -4.875
    %v84 = vmul.f32 %v74, 1.442695
    %v85 = vpow.pop %v84
    %v86 = vmul.f32 %v75, 1.442695
    %v87 = vpow.pop %v86
    %v88 = vmul.f32 %v76, 1.442695
    %v89 = vpow.pop %v88
    %v90 = vmul.f32 %v77, 1.442695
    %v91 = vpow.pop %v90
    %v92 = vmul.f32 %v78, 1.442695
    %v93 = vpow.pop %v92
    %v94 = vmul.f32 %v79, 1.442695
    %v95 = vpow.pop %v94
    %v96 = vmul.f32 %v80, 1.442695
    %v97 = vpow.pop %v96
    %v98 = vmul.f32 %v81, 1.442695
    %v99 = vpow.pop %v98
    %v100 = vmul.f32 %v82, 1.442695
    %v101 = vpow.pop %v100
    %v102 = vmul.f32 %v83, 1.442695
    %v103 = vpow.pop %v102
    %104 = vst [vmem:[#allocation5] sm:$0xff] %v85
    %vm105 = vcmask 613376
    %106 = vst.msk [vmem:[#allocation5 + $0x8] sm:$0xff] %vm105, %v87
    %107 = vst [vmem:[#allocation5 + $0x10] sm:$0xff] %v89
    %108 = vst.msk [vmem:[#allocation5 + $0x18] sm:$0xff] %vm105, %v91
    %109 = vst [vmem:[#allocation5 + $0x20] sm:$0xff] %v93
    %110 = vst.msk [vmem:[#allocation5 + $0x28] sm:$0xff] %vm105, %v95
    %111 = vst [vmem:[#allocation5 + $0x30] sm:$0xff] %v97
    %112 = vst.msk [vmem:[#allocation5 + $0x38] sm:$0xff] %vm105, %v99
    %113 = vst [vmem:[#allocation5 + $0x40] sm:$0xff] %v101
    %114 = vst.msk [vmem:[#allocation5 + $0x48] sm:$0xff] %vm105, %v103
    // Predicated region
    $region10: #{tpu_custom_call.1} parent=1 // pred_check
      _
    $region11: #{tpu_custom_call.1} parent=1 // pred_check_branch
      %116 = sbr.rel (0) target = $region13
    $region12: #{tpu_custom_call.1} parent=1 // pred_region
      %s118 = ssub.s32 1280, 1280
      %119 = vsyncadd [#allocation4], %s118
      %s120 = sshll.u32 [#allocation5], 4
      %s121 = int_to_ptr.vmem [resolvable:$true] %s120
      %126 = dma.vmem_to_hbm [thread:$0]  %s121, 1280, %s1, [#allocation4], 256, 256, 16
    $region13: #{tpu_custom_call.1} parent=1 // pred_fallthru
      _
    // Predicated region
    $region14: #{tpu_custom_call.1} parent=1 // pred_check
      _
    $region15: #{tpu_custom_call.1} parent=1 // pred_check_branch
      %128 = sbr.rel (0) target = $region17
    $region16: #{tpu_custom_call.1} parent=1 // pred_region
      %129 = dma.done [#allocation4], 1280
    $region17: #{tpu_custom_call.1} parent=1 // pred_fallthru
      _
    %130 = vsyncpa [#allocation3], 1
    %131 = vsyncpa [#allocation4], 1

</llo_original>
